<compile_context>
chip_gen: v7x
topology: tpu7x:2x2x1
jax: 0.10.0
libtpu: 0.0.40
codegen_flags: <defaults>
</compile_context>

<pallas_src>
import jax
import jax.numpy as jnp
from jax import lax
from jax.experimental import pallas as pl
from jax.experimental.pallas import tpu as pltpu

_EPS = 1e-8


def _round_up(x, mult):
    return ((x + mult - 1) // mult) * mult


def _vmem_capacity_bytes():
    """Physical VMEM per TensorCore (v5e/v6e: 128 MiB, v7x: 64 MiB)."""
    try:
        cap = int(getattr(pltpu.get_tpu_info(), "vmem_capacity_bytes", 0))
        if cap > 0:
            return cap
    except Exception:
        pass
    try:
        kind = jax.devices()[0].device_kind.lower()
        if "v7" in kind:
            return 64 << 20
        return 128 << 20
    except Exception:
        return 64 << 20  # conservative fallback: safe on every generation


def _tile_bytes(tm, td_pad, in_itemsize, out_itemsize, nbuf):
    """Honest VMEM estimate for one (tm, td) grid step."""
    inputs = 2 * nbuf * tm * td_pad * in_itemsize      # a + b pipeline buffers
    temps = 3 * tm * td_pad * 4                        # in-kernel f32 upcasts / products
    scratch = 3 * tm * 128 * 4                         # (tm,1) f32 accs pad to 128 lanes
    out = 2 * 8 * _round_up(tm, 128) * out_itemsize    # (1,1,tm) output blocks
    return inputs + temps + scratch + out


def _choose_tiles(m, d, in_itemsize, out_itemsize, budget, row_cap=1024):
    """Pick (row_tile, d_tile).

    Prefers full-D blocks with the largest row tile; splits the reduction axis
    onto a second ("arbitrary") grid axis when full-D would push the row tile
    below ~512 (large D), so output stores stay lane-dense and grid steps stay big.
    """
    d_pad = _round_up(d, 128)

    def fits(tm, td_pad, nbuf=2):
        return _tile_bytes(tm, td_pad, in_itemsize, out_itemsize, nbuf) <= budget

    # Path 1: no D split -- largest row tile (multiple of 128) that fits.
    tm_full = 0
    tm = max((row_cap // 128) * 128, 128)
    while tm >= 128:
        if fits(tm, d_pad):
            tm_full = tm
            break
        tm -= 128
    if tm_full >= 512 or (tm_full > 0 and tm_full >= _round_up(m, 8)):
        return tm_full, d

    # Path 2: split D; keep the row tile >= 128.
    tm = max(min(512, (row_cap // 128) * 128), 128)
    while tm >= 128:
        per_col = tm * (2 * 2 * in_itemsize + 3 * 4)   # inputs (2 bufs) + f32 temps
        fixed = 3 * tm * 128 * 4 + 2 * 8 * _round_up(tm, 128) * out_itemsize
        avail = budget - fixed
        if avail > 0:
            td = (avail // per_col // 128) * 128
            td = int(min(td, d_pad))
            if td >= 128:
                return tm, td
        tm -= 128
    return 128, 128  # absolute fallback; fits any realistic budget


def _make_similarity_kernel(d, td):
    rem = d % td  # static; nonzero only when the reduction axis is split unevenly

    def kernel(a_ref, b_ref, o_ref, dot_sc, na2_sc, nb2_sc):
        k = pl.program_id(1)

        @pl.when(k == 0)
        def _init():
            dot_sc[...] = jnp.zeros_like(dot_sc)
            na2_sc[...] = jnp.zeros_like(na2_sc)
            nb2_sc[...] = jnp.zeros_like(nb2_sc)

        a = a_ref[...].astype(jnp.float32)
        b = b_ref[...].astype(jnp.float32)

        if rem != 0:
            # Mask garbage lanes of the partial last D block. (Garbage rows in a
            # partial last ROW block are deliberately NOT masked: they are
            # discarded by the wrapper's [:m] slice.)
            col = lax.broadcasted_iota(jnp.int32, a.shape, 1) + k * td
            valid = col < d
            a = jnp.where(valid, a, 0.0)
            b = jnp.where(valid, b, 0.0)

        dot_sc[...] += jnp.sum(a * b, axis=-1, keepdims=True)
        na2_sc[...] += jnp.sum(a * a, axis=-1, keepdims=True)
        nb2_sc[...] += jnp.sum(b * b, axis=-1, keepdims=True)

        @pl.when(k == pl.num_programs(1) - 1)
        def _finalize():
            # (1 + a.b / max(||a||*||b||, eps)) / 2, with the clamp expressed as
            # min(rsqrt(na2)*rsqrt(nb2), 1/eps) so na2*nb2 never overflows f32.
            inv = jnp.minimum(
                lax.rsqrt(jnp.maximum(na2_sc[...], 0.0))
                * lax.rsqrt(jnp.maximum(nb2_sc[...], 0.0)),
                jnp.float32(1.0 / _EPS),
            )
            res = (1.0 + dot_sc[...] * inv) * 0.5            # (tm, 1) f32
            # Lane-dense store: (tm,1) -> (1,tm) relayout goes through the XLU.
            o_ref[...] = jnp.transpose(res)[None].astype(o_ref.dtype)

    return kernel


def _input_spec(tm, td, nbuf):
    if nbuf > 2:
        try:
            return pl.BlockSpec((tm, td), lambda i, k: (i, k),
                                pipeline_mode=pl.Buffered(nbuf))
        except TypeError:
            pass
    return pl.BlockSpec((tm, td), lambda i, k: (i, k))


def similarity(a, b, *, row_tile_cap=1024, _force_tiles=None):
    """(1 + cosine_similarity(a, b, dim=-1, eps=1e-8)) / 2 via a Pallas TPU kernel."""
    assert a.shape == b.shape, "broadcasting of differing shapes not implemented"
    lead_shape = a.shape[:-1]
    d = a.shape[-1]
    m = 1
    for s in lead_shape:
        m *= s

    out_dtype = jnp.result_type(a.dtype, b.dtype)
    if m == 0:
        return jnp.zeros(lead_shape, dtype=out_dtype)
    if d == 0:
        return jnp.full(lead_shape, 0.5, dtype=out_dtype)

    # Inputs stay in storage dtype through the DMA (bandwidth-bound kernel).
    a2 = a.reshape(m, d)
    b2 = b.reshape(m, d)

    in_itemsize = max(jnp.dtype(a.dtype).itemsize, jnp.dtype(b.dtype).itemsize)
    out_itemsize = jnp.dtype(out_dtype).itemsize

    vmem_cap = _vmem_capacity_bytes()
    vmem_limit = int(min(0.55 * vmem_cap, 96 << 20))   # ~70 MiB on 128 MiB parts, ~35 MiB on v7x
    tile_budget = int(0.85 * vmem_limit)               # headroom for Mosaic internals

    if _force_tiles is not None:
        tm, td = _force_tiles                           # testing hook for the D-split path
    else:
        tm, td = _choose_tiles(m, d, in_itemsize, out_itemsize, tile_budget,
                               row_cap=row_tile_cap)
        if m <= tm:
            if m >= 256:
                # keep >= 2 row blocks so the "parallel" axis shards across both
                # v7x TensorCores (neutral on single-TC v5e/v6e).
                tm = min(tm, _round_up(pl.cdiv(m, 2), 128))
            else:
                tm = m                                  # single full-array block

    num_row_blocks = pl.cdiv(m, tm)
    num_d_blocks = pl.cdiv(d, td)

    # Deeper input pipelining when per-step tiles are small and the grid is long.
    nbuf = 2
    if tm * _round_up(td, 128) * in_itemsize <= (256 << 10) and \
            (num_row_blocks * num_d_blocks) >= 4:
        nbuf = 3

    cost = pl.CostEstimate(
        flops=6 * m * d,
        transcendentals=2 * m,
        bytes_accessed=m * d * (jnp.dtype(a.dtype).itemsize + jnp.dtype(b.dtype).itemsize)
        + m * out_itemsize,
    )

    out = pl.pallas_call(
        _make_similarity_kernel(d, td),
        out_shape=jax.ShapeDtypeStruct((num_row_blocks, 1, tm), out_dtype),
        grid_spec=pltpu.PrefetchScalarGridSpec(
            num_scalar_prefetch=0,
            grid=(num_row_blocks, num_d_blocks),        # reduction axis last
            in_specs=[
                _input_spec(tm, td, nbuf),
                _input_spec(tm, td, nbuf),
            ],
            out_specs=pl.BlockSpec((1, 1, tm), lambda i, k: (i, 0, 0)),
            scratch_shapes=[
                pltpu.VMEM((tm, 1), jnp.float32),       # dot accumulator
                pltpu.VMEM((tm, 1), jnp.float32),       # ||a||^2 accumulator
                pltpu.VMEM((tm, 1), jnp.float32),       # ||b||^2 accumulator
            ],
        ),
        compiler_params=pltpu.CompilerParams(
            dimension_semantics=("parallel", "arbitrary"),
            vmem_limit_bytes=vmem_limit,
        ),
        cost_estimate=cost,
    )(a2, b2)

    # Flatten lane-dense blocks back to per-row results; drop padded tail rows.
    return out.reshape(-1)[:m].reshape(lead_shape)


def _reference(a, b):
    a32 = a.astype(jnp.float32)
    b32 = b.astype(jnp.float32)
    dot = jnp.sum(a32 * b32, axis=-1)
    denom = jnp.maximum(
        jnp.linalg.norm(a32, axis=-1) * jnp.linalg.norm(b32, axis=-1), _EPS
    )
    return (1.0 + dot / denom) / 2.0


if __name__ == "__main__":
    key = jax.random.PRNGKey(0)
    ka, kb, kc, kd, ke, kf = jax.random.split(key, 6)

    # batch=2, seq=8, hidden=32 (cosine similarity reduces over hidden)
    a = jax.random.normal(ka, (2, 8, 32), dtype=jnp.float32)
    b = jax.random.normal(kb, (2, 8, 32), dtype=jnp.float32)
    out = similarity(a, b)
    jax.block_until_ready(out)
    ref = _reference(a, b)
    assert out.shape == (2, 8)
    assert jnp.allclose(out, ref, atol=1e-5, rtol=1e-5), "mismatch vs reference"

    # Multi-row-block + partial-last-row-block path (2 blocks of 256, tail=44).
    a_big = jax.random.normal(kc, (300, 32), dtype=jnp.float32)
    b_big = jax.random.normal(kd, (300, 32), dtype=jnp.float32)
    out_big = similarity(a_big, b_big)
    jax.block_until_ready(out_big)
    ref_big = _reference(a_big, b_big)
    assert out_big.shape == (300,)
    assert jnp.allclose(out_big, ref_big, atol=1e-5, rtol=1e-5), "mismatch (multi-block)"

    # D-split ("arbitrary" reduction axis) + partial-last-D-block masking path,
    # exercised at a small shape via the tile-override hook.
    a_d = jax.random.normal(ke, (16, 320), dtype=jnp.float32)
    b_d = jax.random.normal(kf, (16, 320), dtype=jnp.float32)
    out_d = similarity(a_d, b_d, _force_tiles=(16, 128))
    jax.block_until_ready(out_d)
    ref_d = _reference(a_d, b_d)
    assert out_d.shape == (16,)
    assert jnp.allclose(out_d, ref_d, atol=1e-5, rtol=1e-5), "mismatch (D-split)"

    # bf16 storage-dtype path (DMA in bf16, math in f32, downcast on store).
    a16 = a.astype(jnp.bfloat16)
    b16 = b.astype(jnp.bfloat16)
    out16 = similarity(a16, b16)
    jax.block_until_ready(out16)
    ref16 = _reference(a16, b16)
    assert out16.shape == (2, 8)
    assert jnp.allclose(out16.astype(jnp.float32), ref16, atol=1e-2), "mismatch (bf16)"

    print("KERNEL_OK")
</pallas_src>

<mosaic_0001>
module attributes {stable_mosaic.version = 11 : i64} {
  func.func @kernel(%arg0: i32, %arg1: i32, %arg2: memref<16x32xf32, #tpu.memory_space<vmem>>, %arg3: memref<16x32xf32, #tpu.memory_space<vmem>>, %arg4: memref<1x1x16xf32, #tpu.memory_space<vmem>>, %arg5: memref<16x1xf32, #tpu.memory_space<vmem>>, %arg6: memref<16x1xf32, #tpu.memory_space<vmem>>, %arg7: memref<16x1xf32, #tpu.memory_space<vmem>>) attributes {dimension_semantics = [#tpu.dimension_semantics<parallel>, #tpu.dimension_semantics<arbitrary>], iteration_bounds = array<i64: 1, 1>, scalar_prefetch = 0 : i64, scratch_operands = 3 : i64, tpu.core_type = #tpu.core_type<tc>, window_params = [{transform_indices = @transform_0, window_bounds = array<i64: 16, 32>}, {transform_indices = @transform_1, window_bounds = array<i64: 16, 32>}, {transform_indices = @transform_2, window_bounds = array<i64: 1, 1, 16>}]} {
    %c0_i32 = arith.constant 0 : i32
    %0 = arith.cmpi eq, %arg1, %c0_i32 : i32
    %1 = arith.extui %0 : i1 to i32
    %c0_i32_0 = arith.constant 0 : i32
    %2 = arith.cmpi ne, %1, %c0_i32_0 : i32
    scf.if %2 {
      %cst_20 = arith.constant 0.000000e+00 : f32
      %26 = vector.broadcast %cst_20 : f32 to vector<16x1xf32>
      %c0_21 = arith.constant 0 : index
      %c0_22 = arith.constant 0 : index
      %27 = vector.load %arg5[%c0_21, %c0_22] : memref<16x1xf32, #tpu.memory_space<vmem>>, vector<16x1xf32>
      tpu.vector_store %arg5[%c0_21, %c0_22], %26 {strides = array<i32>} : memref<16x1xf32, #tpu.memory_space<vmem>>, vector<16x1xf32>,
      %cst_23 = arith.constant 0.000000e+00 : f32
      %28 = vector.broadcast %cst_23 : f32 to vector<16x1xf32>
      %c0_24 = arith.constant 0 : index
      %c0_25 = arith.constant 0 : index
      %29 = vector.load %arg6[%c0_24, %c0_25] : memref<16x1xf32, #tpu.memory_space<vmem>>, vector<16x1xf32>
      tpu.vector_store %arg6[%c0_24, %c0_25], %28 {strides = array<i32>} : memref<16x1xf32, #tpu.memory_space<vmem>>, vector<16x1xf32>,
      %cst_26 = arith.constant 0.000000e+00 : f32
      %30 = vector.broadcast %cst_26 : f32 to vector<16x1xf32>
      %c0_27 = arith.constant 0 : index
      %c0_28 = arith.constant 0 : index
      %31 = vector.load %arg7[%c0_27, %c0_28] : memref<16x1xf32, #tpu.memory_space<vmem>>, vector<16x1xf32>
      tpu.vector_store %arg7[%c0_27, %c0_28], %30 {strides = array<i32>} : memref<16x1xf32, #tpu.memory_space<vmem>>, vector<16x1xf32>,
    } else {
    }
    %c0 = arith.constant 0 : index
    %c0_1 = arith.constant 0 : index
    %3 = vector.load %arg2[%c0, %c0_1] : memref<16x32xf32, #tpu.memory_space<vmem>>, vector<16x32xf32>
    %c0_2 = arith.constant 0 : index
    %c0_3 = arith.constant 0 : index
    %4 = vector.load %arg3[%c0_2, %c0_3] : memref<16x32xf32, #tpu.memory_space<vmem>>, vector<16x32xf32>
    %c0_4 = arith.constant 0 : index
    %c0_5 = arith.constant 0 : index
    %5 = vector.load %arg5[%c0_4, %c0_5] : memref<16x1xf32, #tpu.memory_space<vmem>>, vector<16x1xf32>
    %6 = arith.mulf %3, %4 : vector<16x32xf32>
    %cst = arith.constant dense<0.000000e+00> : vector<16xf32>
    %7 = vector.multi_reduction <add>, %6, %cst [1] : vector<16x32xf32> to vector<16xf32>
    %8 = vector.shape_cast %7 : vector<16xf32> to vector<16x1xf32>
    %9 = arith.addf %5, %8 : vector<16x1xf32>
    %c0_6 = arith.constant 0 : index
    %c0_7 = arith.constant 0 : index
    %10 = vector.load %arg5[%c0_6, %c0_7] : memref<16x1xf32, #tpu.memory_space<vmem>>, vector<16x1xf32>
    tpu.vector_store %arg5[%c0_6, %c0_7], %9 {strides = array<i32>} : memref<16x1xf32, #tpu.memory_space<vmem>>, vector<16x1xf32>,
    %c0_8 = arith.constant 0 : index
    %c0_9 = arith.constant 0 : index
    %11 = vector.load %arg6[%c0_8, %c0_9] : memref<16x1xf32, #tpu.memory_space<vmem>>, vector<16x1xf32>
    %12 = arith.mulf %3, %3 : vector<16x32xf32>
    %cst_10 = arith.constant dense<0.000000e+00> : vector<16xf32>
    %13 = vector.multi_reduction <add>, %12, %cst_10 [1] : vector<16x32xf32> to vector<16xf32>
    %14 = vector.shape_cast %13 : vector<16xf32> to vector<16x1xf32>
    %15 = arith.addf %11, %14 : vector<16x1xf32>
    %c0_11 = arith.constant 0 : index
    %c0_12 = arith.constant 0 : index
    %16 = vector.load %arg6[%c0_11, %c0_12] : memref<16x1xf32, #tpu.memory_space<vmem>>, vector<16x1xf32>
    tpu.vector_store %arg6[%c0_11, %c0_12], %15 {strides = array<i32>} : memref<16x1xf32, #tpu.memory_space<vmem>>, vector<16x1xf32>,
    %c0_13 = arith.constant 0 : index
    %c0_14 = arith.constant 0 : index
    %17 = vector.load %arg7[%c0_13, %c0_14] : memref<16x1xf32, #tpu.memory_space<vmem>>, vector<16x1xf32>
    %18 = arith.mulf %4, %4 : vector<16x32xf32>
    %cst_15 = arith.constant dense<0.000000e+00> : vector<16xf32>
    %19 = vector.multi_reduction <add>, %18, %cst_15 [1] : vector<16x32xf32> to vector<16xf32>
    %20 = vector.shape_cast %19 : vector<16xf32> to vector<16x1xf32>
    %21 = arith.addf %17, %20 : vector<16x1xf32>
    %c0_16 = arith.constant 0 : index
    %c0_17 = arith.constant 0 : index
    %22 = vector.load %arg7[%c0_16, %c0_17] : memref<16x1xf32, #tpu.memory_space<vmem>>, vector<16x1xf32>
    tpu.vector_store %arg7[%c0_16, %c0_17], %21 {strides = array<i32>} : memref<16x1xf32, #tpu.memory_space<vmem>>, vector<16x1xf32>,
    %c0_i32_18 = arith.constant 0 : i32
    %23 = arith.cmpi eq, %arg1, %c0_i32_18 : i32
    %24 = arith.extui %23 : i1 to i32
    %c0_i32_19 = arith.constant 0 : i32
    %25 = arith.cmpi ne, %24, %c0_i32_19 : i32
    scf.if %25 {
      %c0_20 = arith.constant 0 : index
      %c0_21 = arith.constant 0 : index
      %26 = vector.load %arg6[%c0_20, %c0_21] : memref<16x1xf32, #tpu.memory_space<vmem>>, vector<16x1xf32>
      %cst_22 = arith.constant 0.000000e+00 : f32
      %27 = vector.broadcast %cst_22 : f32 to vector<16x1xf32>
      %28 = arith.maximumf %26, %27 : vector<16x1xf32>
      %29 = math.rsqrt %28 : vector<16x1xf32>
      %c0_23 = arith.constant 0 : index
      %c0_24 = arith.constant 0 : index
      %30 = vector.load %arg7[%c0_23, %c0_24] : memref<16x1xf32, #tpu.memory_space<vmem>>, vector<16x1xf32>
      %cst_25 = arith.constant 0.000000e+00 : f32
      %31 = vector.broadcast %cst_25 : f32 to vector<16x1xf32>
      %32 = arith.maximumf %30, %31 : vector<16x1xf32>
      %33 = math.rsqrt %32 : vector<16x1xf32>
      %34 = arith.mulf %29, %33 : vector<16x1xf32>
      %cst_26 = arith.constant 1.000000e+08 : f32
      %35 = vector.broadcast %cst_26 : f32 to vector<16x1xf32>
      %36 = arith.minimumf %34, %35 : vector<16x1xf32>
      %c0_27 = arith.constant 0 : index
      %c0_28 = arith.constant 0 : index
      %37 = vector.load %arg5[%c0_27, %c0_28] : memref<16x1xf32, #tpu.memory_space<vmem>>, vector<16x1xf32>
      %38 = arith.mulf %37, %36 : vector<16x1xf32>
      %cst_29 = arith.constant 1.000000e+00 : f32
      %39 = vector.broadcast %cst_29 : f32 to vector<16x1xf32>
      %40 = arith.addf %39, %38 : vector<16x1xf32>
      %cst_30 = arith.constant 5.000000e-01 : f32
      %41 = vector.broadcast %cst_30 : f32 to vector<16x1xf32>
      %42 = arith.mulf %40, %41 : vector<16x1xf32>
      %43 = tpu.transpose %42, [1, 0] : vector<16x1xf32> -> vector<1x16xf32>
      %44 = vector.shape_cast %43 : vector<1x16xf32> to vector<1x1x16xf32>
      %c0_31 = arith.constant 0 : index
      %c0_32 = arith.constant 0 : index
      %c0_33 = arith.constant 0 : index
      %45 = vector.load %arg4[%c0_31, %c0_32, %c0_33] : memref<1x1x16xf32, #tpu.memory_space<vmem>>, vector<1x1x16xf32>
      tpu.vector_store %arg4[%c0_31, %c0_32, %c0_33], %44 {strides = array<i32>} : memref<1x1x16xf32, #tpu.memory_space<vmem>>, vector<1x1x16xf32>,
    } else {
    }
    return
  }
  func.func @transform_0(%arg0: i32, %arg1: i32) -> (i32, i32) {
    %c0_i32 = arith.constant 0 : i32
    return %arg0, %arg1 : i32, i32
  }
  func.func @transform_1(%arg0: i32, %arg1: i32) -> (i32, i32) {
    %c0_i32 = arith.constant 0 : i32
    return %arg0, %arg1 : i32, i32
  }
  func.func @transform_2(%arg0: i32, %arg1: i32) -> (i32, i32, i32) {
    %c0_i32 = arith.constant 0 : i32
    %c0_i32_0 = arith.constant 0 : i32
    %c0_i32_1 = arith.constant 0 : i32
    return %arg0, %c0_i32, %c0_i32_0 : i32, i32, i32
  }
}

</mosaic_0001>

<llo_original>
// kernel: tpu_custom_call.1
$region0: #{tpu_custom_call.1}
  #allocation0 [shape = 'u32[]', space=smem, size = 0x4, offset = 0x4, fixed_abs, tag = 'smem constant byte address 0x4 - core index']
  #allocation1 [shape = 'u32[144,128]{1,0:T(1,128)}', space=vmem, size = 0x12000, scoped, tag = 'internal scratch']
  #allocation2 [shape = 'f32[16,1]{1,0:T(8,128)}', space=vmem, size = 0x2000, scoped, tag = 'scratch operand']
  #allocation3 [shape = 'f32[16,1]{1,0:T(8,128)}', space=vmem, size = 0x2000, scoped, tag = 'scratch operand']
  #allocation4 [shape = 'f32[16,1]{1,0:T(8,128)}', space=vmem, size = 0x2000, scoped, tag = 'scratch operand']
  %s0 = inlined_call_operand.hbm [shape: f32[16,32], index: 0, kind: input, shape index: {}]
  %s1 = inlined_call_operand.hbm [shape: f32[16,32], index: 1, kind: input, shape index: {}]
  %s2 = inlined_call_operand.hbm [shape: f32[1,1,16], index: 2, kind: output, shape index: {}]
  %s3 = sld [smem:[#allocation0]]
  $region34: #{tpu_custom_call.1} parent=0
    _
  %s5 = ssub.s32 1, %s3
  %s6 = scalar_select 0, %s5, %s3
  $region1: #{tpu_custom_call.1} parent=0
    #allocation5 [shape = 'u8[8192]{0}', space=vmem, size = 0x2000, scoped, tag = 'input window, operand 0, single buffered']
    #allocation6 [shape = 's32[1]{0}', space=sflag, size = 0x4, scoped, tag = 'scoped memory for tpu_custom_call.1']
    #allocation7 [shape = 's32[1]{0}', space=sflag, size = 0x4, scoped, tag = 'scoped memory for tpu_custom_call.1']
    #allocation8 [shape = 'u8[8192]{0}', space=vmem, size = 0x2000, scoped, tag = 'input window, operand 1, single buffered']
    #allocation9 [shape = 's32[1]{0}', space=sflag, size = 0x4, scoped, tag = 'scoped memory for tpu_custom_call.1']
    #allocation10 [shape = 'u8[512]{0}', space=vmem, size = 0x400, scoped, tag = 'output window, operand 0, single buffered']
    %7 = vsyncpa [#allocation6], 0
    %8 = vsyncpa [#allocation9], 0
    %9 = vsyncpa [#allocation7], 0
    // Predicated region
    $region2: #{tpu_custom_call.1} parent=1 // pred_check
      _
    $region3: #{tpu_custom_call.1} parent=1 // pred_check_branch
      %11 = sbr.rel (0) target = $region5
    $region4: #{tpu_custom_call.1} parent=1 // pred_region
      %s13 = ssub.s32 256, 256
      %14 = vsyncadd [#allocation6], %s13
      %s15 = sshll.u32 [#allocation5], 4
      %s16 = int_to_ptr.vmem [resolvable:$true] %s15
      %21 = dma.hbm_to_vmem [thread:$0]  %s0, 256, %s16, [#allocation6], 128, 128, 8
    $region5: #{tpu_custom_call.1} parent=1 // pred_fallthru
      _
    // Predicated region
    $region6: #{tpu_custom_call.1} parent=1 // pred_check
      _
    $region7: #{tpu_custom_call.1} parent=1 // pred_check_branch
      %23 = sbr.rel (0) target = $region9
    $region8: #{tpu_custom_call.1} parent=1 // pred_region
      %s25 = ssub.s32 256, 256
      %26 = vsyncadd [#allocation9], %s25
      %s27 = sshll.u32 [#allocation8], 4
      %s28 = int_to_ptr.vmem [resolvable:$true] %s27
      %33 = dma.hbm_to_vmem [thread:$0]  %s1, 256, %s28, [#allocation9], 128, 128, 8
    $region9: #{tpu_custom_call.1} parent=1 // pred_fallthru
      _
    // Predicated region
    $region10: #{tpu_custom_call.1} parent=1 // pred_check
      _
    $region11: #{tpu_custom_call.1} parent=1 // pred_check_branch
      %35 = sbr.rel (0) target = $region13
    $region12: #{tpu_custom_call.1} parent=1 // pred_region
      %36 = dma.done [#allocation6], 256
    $region13: #{tpu_custom_call.1} parent=1 // pred_fallthru
      _
    // Predicated region
    $region14: #{tpu_custom_call.1} parent=1 // pred_check
      _
    $region15: #{tpu_custom_call.1} parent=1 // pred_check_branch
      %38 = sbr.rel (0) target = $region17
    $region16: #{tpu_custom_call.1} parent=1 // pred_region
      %39 = dma.done [#allocation9], 256
    $region17: #{tpu_custom_call.1} parent=1 // pred_fallthru
      _
    %p40 = scmp.eq.s32.totalorder 0, 0
    // Predicated region
    $region18: #{tpu_custom_call.1} parent=1 // pred_check
      %p41 = pneg %p40
    $region19: #{tpu_custom_call.1} parent=1 // pred_check_branch
      %43 = sbr.rel (%p41) target = $region21
    $region20: #{tpu_custom_call.1} parent=1 // pred_region
      %vm44 = vcmask 7168
      %45 = vst.msk [vmem:[#allocation2] sm:$0xff] %vm44, 0.0
      %46 = vst.msk [vmem:[#allocation2 + $0x8] sm:$0xff] %vm44, 0.0
      %47 = vst.msk [vmem:[#allocation3] sm:$0xff] %vm44, 0.0
      %48 = vst.msk [vmem:[#allocation3 + $0x8] sm:$0xff] %vm44, 0.0
      %49 = vst.msk [vmem:[#allocation4] sm:$0xff] %vm44, 0.0
      %50 = vst.msk [vmem:[#allocation4 + $0x8] sm:$0xff] %vm44, 0.0
    $region21: #{tpu_custom_call.1} parent=1 // pred_fallthru
      _
    %v51 = vld [vmem:[#allocation5] sm:$0xff]
    %v52 = vld [vmem:[#allocation5 + $0x8] sm:$0xff]
    %v53 = vld [vmem:[#allocation8] sm:$0xff]
    %v54 = vld [vmem:[#allocation8 + $0x8] sm:$0xff]
    %v55 = vld [vmem:[#allocation2] sm:$0xff]
    %v56 = vld [vmem:[#allocation2 + $0x8] sm:$0xff]
    %v57 = vmul.f32 %v51, %v53
    %v58 = vmul.f32 %v52, %v54
    %vm59 = vcmask 261120
    %v60 = vsel %vm59, %v57, 0.0
    %61 = vadd.xlane.f32.xlu0 %v60
    %v62 = vpop.xlane.xlu0 %61
    %v63 = vsel %vm59, %v58, 0.0
    %64 = vadd.xlane.f32.xlu0 %v63
    %v65 = vpop.xlane.xlu0 %64
    %v66 = vadd.f32 %v55, %v62
    %v67 = vadd.f32 %v56, %v65
    %vm68 = vcmask 7168
    %69 = vst.msk [vmem:[#allocation2] sm:$0xff] %vm68, %v66
    %70 = vst.msk [vmem:[#allocation2 + $0x8] sm:$0xff] %vm68, %v67
    %v71 = vld [vmem:[#allocation3] sm:$0xff]
    %v72 = vld [vmem:[#allocation3 + $0x8] sm:$0xff]
    %v73 = vmul.f32 %v51, %v51
    %v74 = vmul.f32 %v52, %v52
    %v75 = vsel %vm59, %v73, 0.0
    %76 = vadd.xlane.f32.xlu0 %v75
    %v77 = vpop.xlane.xlu0 %76
    %v78 = vsel %vm59, %v74, 0.0
    %79 = vadd.xlane.f32.xlu0 %v78
    %v80 = vpop.xlane.xlu0 %79
    %v81 = vadd.f32 %v71, %v77
    %v82 = vadd.f32 %v72, %v80
    %83 = vst.msk [vmem:[#allocation3] sm:$0xff] %vm68, %v81
    %84 = vst.msk [vmem:[#allocation3 + $0x8] sm:$0xff] %vm68, %v82
    %v85 = vld [vmem:[#allocation4] sm:$0xff]
    %v86 = vld [vmem:[#allocation4 + $0x8] sm:$0xff]
    %v87 = vmul.f32 %v53, %v53
    %v88 = vmul.f32 %v54, %v54
    %v89 = vsel %vm59, %v87, 0.0
    %90 = vadd.xlane.f32.xlu0 %v89
    %v91 = vpop.xlane.xlu0 %90
    %v92 = vsel %vm59, %v88, 0.0
    %93 = vadd.xlane.f32.xlu0 %v92
    %v94 = vpop.xlane.xlu0 %93
    %v95 = vadd.f32 %v85, %v91
    %v96 = vadd.f32 %v86, %v94
    %97 = vst.msk [vmem:[#allocation4] sm:$0xff] %vm68, %v95
    %98 = vst.msk [vmem:[#allocation4 + $0x8] sm:$0xff] %vm68, %v96
    // Predicated region
    $region22: #{tpu_custom_call.1} parent=1 // pred_check
      %p99 = pneg %p40
    $region23: #{tpu_custom_call.1} parent=1 // pred_check_branch
      %101 = sbr.rel (%p99) target = $region25
    $region24: #{tpu_custom_call.1} parent=1 // pred_region
      %v102 = vld [vmem:[#allocation3] sm:$0xff]
      %v103 = vld [vmem:[#allocation3 + $0x8] sm:$0xff]
      %v104 = vmax.f32 %v102, 0.0
      %v105 = vmax.f32 %v103, 0.0
      %v106 = vrsqrt.pop %v104
      %v107 = vrsqrt.pop %v105
      %v108 = vld [vmem:[#allocation4] sm:$0xff]
      %v109 = vld [vmem:[#allocation4 + $0x8] sm:$0xff]
      %v110 = vmax.f32 %v108, 0.0
      %v111 = vmax.f32 %v109, 0.0
      %v112 = vrsqrt.pop %v110
      %v113 = vrsqrt.pop %v111
      %v114 = vmul.f32 %v106, %v112
      %v115 = vmul.f32 %v107, %v113
      %v116 = vmin.f32 %v114, 1e+08
      %v117 = vmin.f32 %v115, 1e+08
      %v118 = vld [vmem:[#allocation2] sm:$0xff]
      %v119 = vld [vmem:[#allocation2 + $0x8] sm:$0xff]
      %v120 = vmul.f32 %v118, %v116
      %v121 = vmul.f32 %v119, %v117
      %v122 = vadd.f32 %v120, 1.0
      %v123 = vadd.f32 %v121, 1.0
      %v124 = vmul.f32 %v122, 0.5
      %v125 = vmul.f32 %v123, 0.5
      %126 = vxpose.xlu0.b32.start [1/16] %v124, 128
      %127 = vxpose.xlu0.b32.cont [2/16] %v125, 128
      %128 = vxpose.xlu0.b32.cont [3/16] 0.0, 128
      %129 = vxpose.xlu0.b32.cont [4/16] 0.0, 128
      %130 = vxpose.xlu0.b32.cont [5/16] 0.0, 128
      %131 = vxpose.xlu0.b32.cont [6/16] 0.0, 128
      %132 = vxpose.xlu0.b32.cont [7/16] 0.0, 128
      %133 = vxpose.xlu0.b32.cont [8/16] 0.0, 128
      %134 = vxpose.xlu0.b32.cont [9/16] 0.0, 128
      %135 = vxpose.xlu0.b32.cont [10/16] 0.0, 128
      %136 = vxpose.xlu0.b32.cont [11/16] 0.0, 128
      %137 = vxpose.xlu0.b32.cont [12/16] 0.0, 128
      %138 = vxpose.xlu0.b32.cont [13/16] 0.0, 128
      %139 = vxpose.xlu0.b32.cont [14/16] 0.0, 128
      %140 = vxpose.xlu0.b32.cont [15/16] 0.0, 128
      %141 = vxpose.xlu0.b32.end [16/16] 0.0, 128
      %v142 = vpop.trf.xlu0
      %v143 = vpop.trf.xlu0
      %v144 = vpop.trf.xlu0
      %v145 = vpop.trf.xlu0
      %v146 = vpop.trf.xlu0
      %v147 = vpop.trf.xlu0
      %v148 = vpop.trf.xlu0
      %v149 = vpop.trf.xlu0
      %v150 = vpop.trf.xlu0
      %v151 = vpop.trf.xlu0
      %v152 = vpop.trf.xlu0
      %v153 = vpop.trf.xlu0
      %v154 = vpop.trf.xlu0
      %v155 = vpop.trf.xlu0
      %v156 = vpop.trf.xlu0
      %v157 = vpop.trf.xlu0
      %vm158 = vcmask 122880
      %159 = vst.msk [vmem:[#allocation10] sm:$0x1] %vm158, %v142
    $region25: #{tpu_custom_call.1} parent=1 // pred_fallthru
      _
    // Predicated region
    $region26: #{tpu_custom_call.1} parent=1 // pred_check
      _
    $region27: #{tpu_custom_call.1} parent=1 // pred_check_branch
      %161 = sbr.rel (0) target = $region29
    $region28: #{tpu_custom_call.1} parent=1 // pred_region
      %s163 = ssub.s32 16, 16
      %164 = vsyncadd [#allocation7], %s163
      %s166 = sshll.u32 [#allocation10], 4
      %s167 = int_to_ptr.vmem [resolvable:$true] %s166
      %169 = dma.vmem_to_hbm [thread:$0]  %s167, 16, %s2, [#allocation7]
    $region29: #{tpu_custom_call.1} parent=1 // pred_fallthru
      _
    // Predicated region
    $region30: #{tpu_custom_call.1} parent=1 // pred_check
      _
    $region31: #{tpu_custom_call.1} parent=1 // pred_check_branch
      %171 = sbr.rel (0) target = $region33
    $region32: #{tpu_custom_call.1} parent=1 // pred_region
      %172 = dma.done [#allocation7], 16
    $region33: #{tpu_custom_call.1} parent=1 // pred_fallthru
      _
    %173 = vsyncpa [#allocation6], 1
    %174 = vsyncpa [#allocation9], 1
    %175 = vsyncpa [#allocation7], 1

</llo_original>
